<compile_context>
chip_gen: v6e
topology: v6e:2x2x1
jax: 0.10.0
libtpu: 0.0.40
codegen_flags: <defaults>
</compile_context>

<pallas_src>
import jax
import jax.numpy as jnp
from jax.experimental import pallas as pl
from jax.experimental.pallas import tpu as pltpu

DATASETS_CLASSES = {'mnist': 10, 'cifar10': 10, 'cifar100': 100,
                    'cub': 200, 'aircraft': 100, 'cars': 196}

_LANE = 128
_SUBLANE = 8


def _nf_kernel(x_ref, w_ref, b_ref, pt_ref, o_ref):
    # x_ref:  (TB, F)  flattened image tile (f32 or bf16)
    # w_ref:  (F, D)   backbone linear weight (f32 or bf16), resident
    # b_ref:  (1, D)   backbone linear bias (f32), resident
    # pt_ref: (D, Cp)  unit-norm prototypes^T / temperature, zero-padded to
    #                  a lane-dense Cp (multiple of 128), resident
    # o_ref:  (TB, Cp) logits tile

    # Backbone: embeddings = x @ W + b   (MXU, f32 accumulation)
    emb = jnp.dot(x_ref[...], w_ref[...],
                  preferred_element_type=jnp.float32) + b_ref[...]

    # F.normalize(emb, p=2, dim=1): denom = max(||emb||, 1e-12)
    #   == emb * rsqrt(max(sum(emb^2), 1e-24)); rsqrt uses the EUP slot.
    sumsq = jnp.sum(emb * emb, axis=-1, keepdims=True)
    emb_n = emb * jax.lax.rsqrt(jnp.maximum(sumsq, 1e-24))

    # Cosine similarity / temperature. Both operands are already unit-norm
    # (prototypes pre-normalized on host with 1/T folded in), so the module's
    # second normalization inside CosineSimilarity is the identity -> one
    # matmul suffices.
    o_ref[...] = jnp.dot(emb_n, pt_ref[...],
                         preferred_element_type=jnp.float32
                         ).astype(o_ref.dtype)


def _choose_tile_b(B, F, itemsize):
    # ~6 MiB per x tile buffer (double-buffered -> ~12 MiB) leaves room for
    # W, prototypes and output tiles under a 32 MiB scoped-VMEM limit,
    # which is safe on v5e (16 MiB default raised), v6e and v7x alike.
    budget_bytes = 6 * 1024 * 1024
    tb = budget_bytes // max(1, F * itemsize)
    tb = max(_SUBLANE, min(1024, tb))
    tb = (tb // _SUBLANE) * _SUBLANE
    if B <= tb:
        return B          # whole (small) batch in one tile; full-extent block
    return tb
    # TODO(synk): for F beyond ~1.5M elements/row also tile F (reduction grid
    # axis + VMEM accumulator); not needed for the image sizes in the spec.


def nf_model_forward(images, w, b, prototypes, temperature=0.01,
                     compute_dtype=jnp.float32, tile_b=None):
    """images: (B, C, H, W). Returns (B, num_classes) float32 logits."""
    B = images.shape[0]
    x = images.reshape(B, -1)                     # flatten NCHW (torch .view)
    F = x.shape[1]
    D = w.shape[1]
    C = prototypes.shape[0]

    # --- hoisted prototype work (constant across the batch / grid steps) ---
    p = prototypes.astype(jnp.float32)
    p = p / jnp.maximum(jnp.linalg.norm(p, axis=1, keepdims=True), 1e-12)
    p = p / jnp.float32(temperature)              # fold 1/temperature in
    Cp = pl.cdiv(C, _LANE) * _LANE                # lane-dense output width
    pt = jnp.zeros((D, Cp), jnp.float32).at[:, :C].set(p.T)

    # bf16 operands halve HBM traffic for the dominant x stream on v6e/v7x;
    # accumulation inside the kernel stays f32.
    x = x.astype(compute_dtype)
    w_c = w.astype(compute_dtype)
    b2 = b.reshape(1, D).astype(jnp.float32)

    itemsize = jnp.dtype(compute_dtype).itemsize
    tb = tile_b if tile_b is not None else _choose_tile_b(B, F, itemsize)
    Bp = pl.cdiv(B, tb) * tb
    if Bp != B:                                   # pad so tiles divide evenly
        x = jnp.pad(x, ((0, Bp - B), (0, 0)))
    grid = (Bp // tb,)

    cost = pl.CostEstimate(
        flops=2 * Bp * F * D + 2 * Bp * D * Cp + 4 * Bp * D,
        transcendentals=Bp,
        bytes_accessed=(Bp * F * itemsize + F * D * itemsize
                        + D * 4 + D * Cp * 4 + Bp * Cp * 4),
    )

    out = pl.pallas_call(
        _nf_kernel,
        out_shape=jax.ShapeDtypeStruct((Bp, Cp), jnp.float32),
        grid=grid,
        in_specs=[
            pl.BlockSpec((tb, F), lambda i: (i, 0)),     # x tile (pipelined)
            pl.BlockSpec((F, D), lambda i: (0, 0)),      # W       (resident)
            pl.BlockSpec((1, D), lambda i: (0, 0)),      # bias    (resident)
            pl.BlockSpec((D, Cp), lambda i: (0, 0)),     # protos^T(resident)
        ],
        out_specs=pl.BlockSpec((tb, Cp), lambda i: (i, 0)),
        compiler_params=pltpu.CompilerParams(
            dimension_semantics=("parallel",),           # megacore on v7x
            vmem_limit_bytes=32 * 1024 * 1024,
        ),
        cost_estimate=cost,
    )(x, w_c, b2, pt)

    return out[:B, :C]


def nf_model_reference(images, w, b, prototypes, temperature=0.01):
    """Pure-JAX reference matching the PyTorch forward (f32 math)."""
    B = images.shape[0]
    x = images.reshape(B, -1).astype(jnp.float32)
    hi = jax.lax.Precision.HIGHEST
    emb = jnp.dot(x, w.astype(jnp.float32), precision=hi) \
        + b.astype(jnp.float32)[None, :]
    emb_n = emb / jnp.maximum(
        jnp.linalg.norm(emb, axis=1, keepdims=True), 1e-12)
    p = prototypes.astype(jnp.float32)
    p_n = p / jnp.maximum(
        jnp.linalg.norm(p, axis=1, keepdims=True), 1e-12)
    dots = jnp.dot(emb_n, p_n.T, precision=hi)
    n1 = jnp.maximum(jnp.linalg.norm(emb_n, axis=-1, keepdims=True), 1e-8)
    n2 = jnp.maximum(jnp.linalg.norm(p_n, axis=-1, keepdims=True), 1e-8)
    return (dots / (n1 * n2.T)) / temperature


if __name__ == "__main__":
    dataset = "mnist"
    num_classes = DATASETS_CLASSES[dataset]
    output_dim = 8
    temperature = 0.01

    B, Cc, H, W = 2, 1, 16, 16
    in_features = Cc * H * W

    key = jax.random.PRNGKey(0)
    k_img, k_w, k_b, k_proto, k_img2 = jax.random.split(key, 5)

    images = jax.random.normal(k_img, (B, Cc, H, W), dtype=jnp.float32)
    # Synthetic backbone (single Linear): deterministic init.
    w = jax.random.normal(k_w, (in_features, output_dim),
                          dtype=jnp.float32) * 0.05
    b = jax.random.normal(k_b, (output_dim,), dtype=jnp.float32) * 0.01
    # prototypes = torch.rand((num_classes, output_dim)) -> uniform [0, 1)
    prototypes = jax.random.uniform(k_proto, (num_classes, output_dim),
                                    dtype=jnp.float32)

    # 1) f32 path, whole (tiny) batch in a single tile.
    out = jax.block_until_ready(
        nf_model_forward(images, w, b, prototypes, temperature))
    ref = nf_model_reference(images, w, b, prototypes, temperature)
    assert out.shape == (B, num_classes)
    assert jnp.allclose(out, ref, atol=2e-3, rtol=2e-3), "f32 mismatch"

    # 2) Exercise the batch grid + padding path (B=18, tile_b=8 -> 3 tiles,
    #    padded to 24 rows, output sliced back).
    B2 = 18
    images2 = jax.random.normal(k_img2, (B2, Cc, H, W), dtype=jnp.float32)
    out2 = jax.block_until_ready(
        nf_model_forward(images2, w, b, prototypes, temperature, tile_b=8))
    ref2 = nf_model_reference(images2, w, b, prototypes, temperature)
    assert out2.shape == (B2, num_classes)
    assert jnp.allclose(out2, ref2, atol=2e-3, rtol=2e-3), "tiled mismatch"

    # 3) bf16 operands for the backbone matmul (v6e/v7x bandwidth win);
    #    compare against a reference fed the same bf16-rounded inputs.
    out_bf = jax.block_until_ready(
        nf_model_forward(images2, w, b, prototypes, temperature,
                         compute_dtype=jnp.bfloat16, tile_b=8))
    ref_bf = nf_model_reference(
        images2.astype(jnp.bfloat16).astype(jnp.float32),
        w.astype(jnp.bfloat16).astype(jnp.float32),
        b, prototypes, temperature)
    assert out_bf.shape == (B2, num_classes)
    assert jnp.allclose(out_bf, ref_bf, atol=1e-2, rtol=5e-3), "bf16 mismatch"

    print("KERNEL_OK")
</pallas_src>

<mosaic_0001>
module attributes {stable_mosaic.version = 11 : i64} {
  func.func @_nf_kernel(%arg0: i32, %arg1: memref<2x256xf32, #tpu.memory_space<vmem>>, %arg2: memref<256x8xf32, #tpu.memory_space<vmem>>, %arg3: memref<1x8xf32, #tpu.memory_space<vmem>>, %arg4: memref<8x128xf32, #tpu.memory_space<vmem>>, %arg5: memref<2x128xf32, #tpu.memory_space<vmem>>) attributes {dimension_semantics = [#tpu.dimension_semantics<parallel>], iteration_bounds = array<i64: 1>, scalar_prefetch = 0 : i64, scratch_operands = 0 : i64, tpu.core_type = #tpu.core_type<tc>, window_params = [{transform_indices = @transform_0, window_bounds = array<i64: 2, 256>}, {pipeline_mode = #tpu.pipeline_mode<synchronous>, transform_indices = @transform_1, window_bounds = array<i64: 256, 8>}, {pipeline_mode = #tpu.pipeline_mode<synchronous>, transform_indices = @transform_2, window_bounds = array<i64: 1, 8>}, {pipeline_mode = #tpu.pipeline_mode<synchronous>, transform_indices = @transform_3, window_bounds = array<i64: 8, 128>}, {transform_indices = @transform_4, window_bounds = array<i64: 2, 128>}]} {
    %c0 = arith.constant 0 : index
    %c0_0 = arith.constant 0 : index
    %0 = vector.load %arg1[%c0, %c0_0] : memref<2x256xf32, #tpu.memory_space<vmem>>, vector<2x256xf32>
    %c0_1 = arith.constant 0 : index
    %c0_2 = arith.constant 0 : index
    %1 = vector.load %arg2[%c0_1, %c0_2] : memref<256x8xf32, #tpu.memory_space<vmem>>, vector<256x8xf32>
    %cst = arith.constant dense<0.000000e+00> : vector<2x8xf32>
    %2 = tpu.matmul %0, %1, %cst {dimension_numbers = #tpu.dot_dimension_numbers<[1], [0], [0], [1], [0, 0, 1, 1], [], []>} : vector<2x256xf32>, vector<256x8xf32>, vector<2x8xf32> -> vector<2x8xf32>
    %c0_3 = arith.constant 0 : index
    %c0_4 = arith.constant 0 : index
    %3 = vector.load %arg3[%c0_3, %c0_4] : memref<1x8xf32, #tpu.memory_space<vmem>>, vector<1x8xf32>
    %4 = vector.broadcast %3 : vector<1x8xf32> to vector<2x8xf32>
    %5 = arith.addf %2, %4 : vector<2x8xf32>
    %6 = arith.mulf %5, %5 : vector<2x8xf32>
    %cst_5 = arith.constant dense<0.000000e+00> : vector<2xf32>
    %7 = vector.multi_reduction <add>, %6, %cst_5 [1] : vector<2x8xf32> to vector<2xf32>
    %8 = vector.shape_cast %7 : vector<2xf32> to vector<2x1xf32>
    %cst_6 = arith.constant 1.000000e-24 : f32
    %9 = vector.broadcast %cst_6 : f32 to vector<2x1xf32>
    %10 = arith.maximumf %8, %9 : vector<2x1xf32>
    %11 = math.rsqrt %10 : vector<2x1xf32>
    %12 = vector.broadcast %11 : vector<2x1xf32> to vector<2x8xf32>
    %13 = arith.mulf %5, %12 : vector<2x8xf32>
    %c0_7 = arith.constant 0 : index
    %c0_8 = arith.constant 0 : index
    %14 = vector.load %arg4[%c0_7, %c0_8] : memref<8x128xf32, #tpu.memory_space<vmem>>, vector<8x128xf32>
    %cst_9 = arith.constant dense<0.000000e+00> : vector<2x128xf32>
    %15 = tpu.matmul %13, %14, %cst_9 {dimension_numbers = #tpu.dot_dimension_numbers<[1], [0], [0], [1], [0, 0, 1, 1], [], []>} : vector<2x8xf32>, vector<8x128xf32>, vector<2x128xf32> -> vector<2x128xf32>
    %c0_10 = arith.constant 0 : index
    %c0_11 = arith.constant 0 : index
    %16 = vector.load %arg5[%c0_10, %c0_11] : memref<2x128xf32, #tpu.memory_space<vmem>>, vector<2x128xf32>
    tpu.vector_store %arg5[%c0_10, %c0_11], %15 {strides = array<i32>} : memref<2x128xf32, #tpu.memory_space<vmem>>, vector<2x128xf32>,
    return
  }
  func.func @transform_0(%arg0: i32) -> (i32, i32) {
    %c0_i32 = arith.constant 0 : i32
    %c0_i32_0 = arith.constant 0 : i32
    return %arg0, %c0_i32 : i32, i32
  }
  func.func @transform_1(%arg0: i32) -> (i32, i32) {
    %c0_i32 = arith.constant 0 : i32
    %c0_i32_0 = arith.constant 0 : i32
    %c0_i32_1 = arith.constant 0 : i32
    return %c0_i32, %c0_i32_0 : i32, i32
  }
  func.func @transform_2(%arg0: i32) -> (i32, i32) {
    %c0_i32 = arith.constant 0 : i32
    %c0_i32_0 = arith.constant 0 : i32
    %c0_i32_1 = arith.constant 0 : i32
    return %c0_i32, %c0_i32_0 : i32, i32
  }
  func.func @transform_3(%arg0: i32) -> (i32, i32) {
    %c0_i32 = arith.constant 0 : i32
    %c0_i32_0 = arith.constant 0 : i32
    %c0_i32_1 = arith.constant 0 : i32
    return %c0_i32, %c0_i32_0 : i32, i32
  }
  func.func @transform_4(%arg0: i32) -> (i32, i32) {
    %c0_i32 = arith.constant 0 : i32
    %c0_i32_0 = arith.constant 0 : i32
    return %arg0, %c0_i32 : i32, i32
  }
}

</mosaic_0001>

<llo_original>
// kernel: tpu_custom_call.1
$region0: #{tpu_custom_call.1}
  #allocation0 [shape = 'u32[]', space=smem, size = 0x4, offset = 0x4, fixed_abs, tag = 'smem constant byte address 0x4 - core index']
  #allocation1 [shape = 'u32[144,128]{1,0:T(1,128)}', space=vmem, size = 0x12000, scoped, tag = 'internal scratch']
  %s0 = inlined_call_operand.vmem [shape: f32[2,256], index: 0, kind: input, shape index: {}]
  %s1 = inlined_call_operand.vmem [shape: f32[256,8], index: 1, kind: input, shape index: {}]
  %s2 = inlined_call_operand.vmem [shape: f32[1,8], index: 2, kind: input, shape index: {}]
  %s3 = inlined_call_operand.vmem [shape: f32[8,128], index: 3, kind: input, shape index: {}]
  %s4 = inlined_call_operand.hbm [shape: f32[2,128], index: 4, kind: output, shape index: {}]
  %s5 = sld [smem:[#allocation0]]
  $region26: #{tpu_custom_call.1} parent=0
    _
  %s7 = ssub.s32 1, %s5
  %s8 = scalar_select 0, %s7, %s5
  $region1: #{tpu_custom_call.1} parent=0
    #allocation2 [shape = 'u8[1024]{0}', space=vmem, size = 0x400, scoped, tag = 'output window, operand 0, single buffered']
    #allocation3 [shape = 's32[1]{0}', space=sflag, size = 0x4, scoped, tag = 'scoped memory for tpu_custom_call.1']
    %9 = vsyncpa [#allocation3], 0
    // Predicated region
    $region2: #{tpu_custom_call.1} parent=1 // pred_check
      _
    $region3: #{tpu_custom_call.1} parent=1 // pred_check_branch
      %11 = sbr.rel (0) target = $region5
    $region4: #{tpu_custom_call.1} parent=1 // pred_region
      _
    $region5: #{tpu_custom_call.1} parent=1 // pred_fallthru
      _
    // Predicated region
    $region6: #{tpu_custom_call.1} parent=1 // pred_check
      _
    $region7: #{tpu_custom_call.1} parent=1 // pred_check_branch
      %13 = sbr.rel (0) target = $region9
    $region8: #{tpu_custom_call.1} parent=1 // pred_region
      _
    $region9: #{tpu_custom_call.1} parent=1 // pred_fallthru
      _
    // Predicated region
    $region10: #{tpu_custom_call.1} parent=1 // pred_check
      _
    $region11: #{tpu_custom_call.1} parent=1 // pred_check_branch
      %15 = sbr.rel (0) target = $region13
    $region12: #{tpu_custom_call.1} parent=1 // pred_region
      _
    $region13: #{tpu_custom_call.1} parent=1 // pred_fallthru
      _
    // Predicated region
    $region14: #{tpu_custom_call.1} parent=1 // pred_check
      _
    $region15: #{tpu_custom_call.1} parent=1 // pred_check_branch
      %17 = sbr.rel (0) target = $region17
    $region16: #{tpu_custom_call.1} parent=1 // pred_region
      _
    $region17: #{tpu_custom_call.1} parent=1 // pred_fallthru
      _
    %v18 = vld [vmem:[%s0] sm:$0xf]
    %v19 = vld [vmem:[%s1] sm:$0xff]
    %v20 = vld [vmem:[%s1 + $0x8] sm:$0xff]
    %v21 = vld [vmem:[%s1 + $0x10] sm:$0xff]
    %v22 = vld [vmem:[%s1 + $0x18] sm:$0xff]
    %v23 = vld [vmem:[%s1 + $0x20] sm:$0xff]
    %v24 = vld [vmem:[%s1 + $0x28] sm:$0xff]
    %v25 = vld [vmem:[%s1 + $0x30] sm:$0xff]
    %v26 = vld [vmem:[%s1 + $0x38] sm:$0xff]
    %v27 = vld [vmem:[%s1 + $0x40] sm:$0xff]
    %v28 = vld [vmem:[%s1 + $0x48] sm:$0xff]
    %v29 = vld [vmem:[%s1 + $0x50] sm:$0xff]
    %v30 = vld [vmem:[%s1 + $0x58] sm:$0xff]
    %v31 = vld [vmem:[%s1 + $0x60] sm:$0xff]
    %v32 = vld [vmem:[%s1 + $0x68] sm:$0xff]
    %v33 = vld [vmem:[%s1 + $0x70] sm:$0xff]
    %v34 = vld [vmem:[%s1 + $0x78] sm:$0xff]
    %v35 = vld [vmem:[%s1 + $0x80] sm:$0xff]
    %v36 = vld [vmem:[%s1 + $0x88] sm:$0xff]
    %v37 = vld [vmem:[%s1 + $0x90] sm:$0xff]
    %v38 = vld [vmem:[%s1 + $0x98] sm:$0xff]
    %v39 = vld [vmem:[%s1 + $0xa0] sm:$0xff]
    %v40 = vld [vmem:[%s1 + $0xa8] sm:$0xff]
    %v41 = vld [vmem:[%s1 + $0xb0] sm:$0xff]
    %v42 = vld [vmem:[%s1 + $0xb8] sm:$0xff]
    %v43 = vld [vmem:[%s1 + $0xc0] sm:$0xff]
    %v44 = vld [vmem:[%s1 + $0xc8] sm:$0xff]
    %v45 = vld [vmem:[%s1 + $0xd0] sm:$0xff]
    %v46 = vld [vmem:[%s1 + $0xd8] sm:$0xff]
    %v47 = vld [vmem:[%s1 + $0xe0] sm:$0xff]
    %v48 = vld [vmem:[%s1 + $0xe8] sm:$0xff]
    %v49 = vld [vmem:[%s1 + $0xf0] sm:$0xff]
    %v50 = vld [vmem:[%s1 + $0xf8] sm:$0xff]
    %v51 = vld [vmem:[%s2] sm:$0x1]
    %v53 = vlaneseq
    %v54 = vshrl.u32 %v53, 7
    %v55 = vsub.s32 0, %v54
    %v56 = vrot.slane %v51, %v55
    %v60 = vunpack.c.l.s4 1983009808
    %v61 = vunpack.c.0.s8 %v60
    %v62 = vlaneseq
    %v63 = vshrl.u32 %v62, 7
    %v64 = vsub.s32 %v61, %v63
    %v65 = vrot.slane %v18, %v64
    %v66 = vcombine.high %v65, %v65
    %69 = vmatprep.subr.mxu0 0.0
    %70 = vmatpush1.msra.mxu0 %v34
    %71 = vmatprep.subr.mxu0 0.0
    %72 = vmatpush1.msra.mxu0 %v33
    %73 = vmatprep.subr.mxu0 0.0
    %74 = vmatpush1.msra.mxu0 %v32
    %75 = vmatprep.subr.mxu0 0.0
    %76 = vmatpush1.msra.mxu0 %v31
    %77 = vmatprep.subr.mxu0 0.0
    %78 = vmatpush1.msra.mxu0 %v30
    %79 = vmatprep.subr.mxu0 0.0
    %80 = vmatpush1.msra.mxu0 %v29
    %81 = vmatprep.subr.mxu0 0.0
    %82 = vmatpush1.msra.mxu0 %v28
    %83 = vmatprep.subr.mxu0 0.0
    %84 = vmatpush1.msra.mxu0 %v27
    %85 = vmatprep.subr.mxu0 0.0
    %86 = vmatpush1.msra.mxu0 %v26
    %87 = vmatprep.subr.mxu0 0.0
    %88 = vmatpush1.msra.mxu0 %v25
    %89 = vmatprep.subr.mxu0 0.0
    %90 = vmatpush1.msra.mxu0 %v24
    %91 = vmatprep.subr.mxu0 0.0
    %92 = vmatpush1.msra.mxu0 %v23
    %93 = vmatprep.subr.mxu0 0.0
    %94 = vmatpush1.msra.mxu0 %v22
    %95 = vmatprep.subr.mxu0 0.0
    %96 = vmatpush1.msra.mxu0 %v21
    %97 = vmatprep.subr.mxu0 0.0
    %98 = vmatpush1.msra.mxu0 %v20
    %99 = vmatprep.subr.mxu0 0.0
    %100 = vmatpush1.msra.mxu0 %v19
    %101 = vmatprep.subr.mxu0 0.0
    %102 = vmatpush2.msra.mxu0 %v50
    %103 = vmatprep.subr.mxu0 0.0
    %104 = vmatpush2.msra.mxu0 %v49
    %105 = vmatprep.subr.mxu0 0.0
    %106 = vmatpush2.msra.mxu0 %v48
    %107 = vmatprep.subr.mxu0 0.0
    %108 = vmatpush2.msra.mxu0 %v47
    %109 = vmatprep.subr.mxu0 0.0
    %110 = vmatpush2.msra.mxu0 %v46
    %111 = vmatprep.subr.mxu0 0.0
    %112 = vmatpush2.msra.mxu0 %v45
    %113 = vmatprep.subr.mxu0 0.0
    %114 = vmatpush2.msra.mxu0 %v44
    %115 = vmatprep.subr.mxu0 0.0
    %116 = vmatpush2.msra.mxu0 %v43
    %117 = vmatprep.subr.mxu0 0.0
    %118 = vmatpush2.msra.mxu0 %v42
    %119 = vmatprep.subr.mxu0 0.0
    %120 = vmatpush2.msra.mxu0 %v41
    %121 = vmatprep.subr.mxu0 0.0
    %122 = vmatpush2.msra.mxu0 %v40
    %123 = vmatprep.subr.mxu0 0.0
    %124 = vmatpush2.msra.mxu0 %v39
    %125 = vmatprep.subr.mxu0 0.0
    %126 = vmatpush2.msra.mxu0 %v38
    %127 = vmatprep.subr.mxu0 0.0
    %128 = vmatpush2.msra.mxu0 %v37
    %129 = vmatprep.subr.mxu0 0.0
    %130 = vmatpush2.msra.mxu0 %v36
    %131 = vmatprep.subr.mxu0 0.0
    %132 = vmatpush2.msra.mxu0 %v35
    %133 = vmatprep.mubr.f32.mxu0 %v66
    %134 = vmatmul.mubr.f32.gmra.mxu0 %v65
    %v135 = vpop.f32.mrf.mxu0
    %v136 = vadd.f32 %v56, %v135
    %v137 = vpop.f32.mrf.mxu0
    %138 = vdwg.mxu0
    %v139 = vmul.f32 %v136, %v136
    %vm140 = vcmask 58368
    %v141 = vsel %vm140, %v139, 0.0
    %142 = vadd.xlane.f32.xlu0 %v141
    %v143 = vpop.xlane.xlu0 %142
    %v144 = vmax.f32 %v143, 1e-24
    %v145 = vrsqrt.pop %v144
    %v146 = vmul.f32 %v136, %v145
    %v147 = vld [vmem:[%s3] sm:$0xff]
    %vm148 = vcmask 64512
    %v150 = vsel %vm148, %v146, 0
    %152 = vmatprep.subr.mxu0 0.0
    %153 = vmatpush1.msra.mxu0 0.0
    %154 = vmatprep.subr.mxu0 0.0
    %155 = vmatpush1.msra.mxu0 0.0
    %156 = vmatprep.subr.mxu0 0.0
    %157 = vmatpush1.msra.mxu0 0.0
    %158 = vmatprep.subr.mxu0 0.0
    %159 = vmatpush1.msra.mxu0 0.0
    %160 = vmatprep.subr.mxu0 0.0
    %161 = vmatpush1.msra.mxu0 0.0
    %162 = vmatprep.subr.mxu0 0.0
    %163 = vmatpush1.msra.mxu0 0.0
    %164 = vmatprep.subr.mxu0 0.0
    %165 = vmatpush1.msra.mxu0 0.0
    %166 = vmatprep.subr.mxu0 0.0
    %167 = vmatpush1.msra.mxu0 0.0
    %168 = vmatprep.subr.mxu0 0.0
    %169 = vmatpush1.msra.mxu0 0.0
    %170 = vmatprep.subr.mxu0 0.0
    %171 = vmatpush1.msra.mxu0 0.0
    %172 = vmatprep.subr.mxu0 0.0
    %173 = vmatpush1.msra.mxu0 0.0
    %174 = vmatprep.subr.mxu0 0.0
    %175 = vmatpush1.msra.mxu0 0.0
    %176 = vmatprep.subr.mxu0 0.0
    %177 = vmatpush1.msra.mxu0 0.0
    %178 = vmatprep.subr.mxu0 0.0
    %179 = vmatpush1.msra.mxu0 0.0
    %180 = vmatprep.subr.mxu0 0.0
    %181 = vmatpush1.msra.mxu0 0.0
    %182 = vmatprep.subr.mxu0 0.0
    %183 = vmatpush1.msra.mxu0 %v147
    %184 = vmatprep.subr.mxu0 0.0
    %185 = vmatpush2.msra.mxu0 0.0
    %186 = vmatprep.subr.mxu0 0.0
    %187 = vmatpush2.msra.mxu0 0.0
    %188 = vmatprep.subr.mxu0 0.0
    %189 = vmatpush2.msra.mxu0 0.0
    %190 = vmatprep.subr.mxu0 0.0
    %191 = vmatpush2.msra.mxu0 0.0
    %192 = vmatprep.subr.mxu0 0.0
    %193 = vmatpush2.msra.mxu0 0.0
    %194 = vmatprep.subr.mxu0 0.0
    %195 = vmatpush2.msra.mxu0 0.0
    %196 = vmatprep.subr.mxu0 0.0
    %197 = vmatpush2.msra.mxu0 0.0
    %198 = vmatprep.subr.mxu0 0.0
    %199 = vmatpush2.msra.mxu0 0.0
    %200 = vmatprep.subr.mxu0 0.0
    %201 = vmatpush2.msra.mxu0 0.0
    %202 = vmatprep.subr.mxu0 0.0
    %203 = vmatpush2.msra.mxu0 0.0
    %204 = vmatprep.subr.mxu0 0.0
    %205 = vmatpush2.msra.mxu0 0.0
    %206 = vmatprep.subr.mxu0 0.0
    %207 = vmatpush2.msra.mxu0 0.0
    %208 = vmatprep.subr.mxu0 0.0
    %209 = vmatpush2.msra.mxu0 0.0
    %210 = vmatprep.subr.mxu0 0.0
    %211 = vmatpush2.msra.mxu0 0.0
    %212 = vmatprep.subr.mxu0 0.0
    %213 = vmatpush2.msra.mxu0 0.0
    %214 = vmatprep.subr.mxu0 0.0
    %215 = vmatpush2.msra.mxu0 0.0
    %216 = vmatprep.mubr.f32.mxu0 0.0
    %217 = vmatmul.mubr.f32.gmra.mxu0 %v150
    %v218 = vpop.f32.mrf.mxu0
    %v219 = vadd.f32 0.0, %v218
    %v220 = vpop.f32.mrf.mxu0
    %221 = vdwg.mxu0
    %222 = vst [vmem:[#allocation2] sm:$0x3] %v219
    // Predicated region
    $region18: #{tpu_custom_call.1} parent=1 // pred_check
      _
    $region19: #{tpu_custom_call.1} parent=1 // pred_check_branch
      %224 = sbr.rel (0) target = $region21
    $region20: #{tpu_custom_call.1} parent=1 // pred_region
      %s226 = ssub.s32 32, 32
      %227 = vsyncadd [#allocation3], %s226
      %s229 = sshll.u32 [#allocation2], 4
      %s230 = int_to_ptr.vmem [resolvable:$true] %s229
      %232 = dma.vmem_to_hbm [thread:$0]  %s230, 32, %s4, [#allocation3]
    $region21: #{tpu_custom_call.1} parent=1 // pred_fallthru
      _
    // Predicated region
    $region22: #{tpu_custom_call.1} parent=1 // pred_check
      _
    $region23: #{tpu_custom_call.1} parent=1 // pred_check_branch
      %234 = sbr.rel (0) target = $region25
    $region24: #{tpu_custom_call.1} parent=1 // pred_region
      %235 = dma.done [#allocation3], 32
    $region25: #{tpu_custom_call.1} parent=1 // pred_fallthru
      _
    %236 = vsyncpa [#allocation3], 1

</llo_original>
